<compile_context>
chip_gen: v7x
topology: tpu7x:2x2x1
jax: 0.10.0
libtpu: 0.0.40
codegen_flags: <defaults>
</compile_context>

<pallas_src>
import jax
import jax.numpy as jnp
import numpy as np
from jax.experimental import pallas as pl
from jax.experimental.pallas import tpu as pltpu

# --- Small, module-consistent hyper-parameters -------------------------------------
NOISE_DIM = 32
FINAL_WINDOW_LENGTH = 32            # must be divisible by 8
INPUT_DIM = 4
BASE_CHANNELS = 64
BATCH = 4

L0 = FINAL_WINDOW_LENGTH // 8       # 4   (self.final_window_length)
C0 = BASE_CHANNELS                  # 64
C1 = BASE_CHANNELS // 2             # 32
C2 = BASE_CHANNELS // 4             # 16
BN_EPS = 1e-5
LRELU_SLOPE = 0.2

# Lane-packed activation widths (col = position * C + channel).
LC0 = L0 * C0                       # 256  FC output / stage-1 input
LC1 = 2 * L0 * C1                   # 256  stage-2 input
LC2 = 4 * L0 * C2                   # 256  stage-3 input
LC3 = 8 * L0 * INPUT_DIM            # 128  final lane-dense output slab

# Row offsets inside the packed bf16 weight slab.
ROW_FC = 0
ROW_A1 = ROW_FC + NOISE_DIM         # 32
ROW_A2 = ROW_A1 + LC0               # 288
ROW_A3 = ROW_A2 + LC1               # 544
W_ROWS = ROW_A3 + LC2               # 800

_VMEM = pl.BlockSpec(memory_space=pltpu.MemorySpace.VMEM)


# ------------------------------- Fused Pallas kernel --------------------------------
def _generator_kernel(noise_ref, w_ref, vec_ref, out_ref):
    """Whole Generator.forward; activations stay lane-packed (N, L*C) in VMEM/vregs."""
    n = noise_ref.shape[0]
    f32, bf16 = jnp.float32, jnp.bfloat16

    def tile_lanes(v, reps):
        # Broadcast a (1, C) per-channel vector to (1, reps*C) via doubling concats
        # (reps is a power of two).
        while reps > 1:
            v = jnp.concatenate([v, v], axis=1)
            reps //= 2
        return v

    def bn_lrelu(x, L, C, gamma, beta):
        # Training-mode BatchNorm1d (biased var, one pass E[x^2]-mean^2) + LeakyReLU.
        # x: (n, L*C), lanes = (position, channel); stats per channel over n*L.
        inv_cnt = 1.0 / (n * L)
        s, ss, w = x, x * x, L * C
        while w > C:                                  # log-tree sum over positions
            hw = w // 2
            s = s[:, :hw] + s[:, hw:]
            ss = ss[:, :hw] + ss[:, hw:]
            w = hw
        mean = jnp.sum(s, axis=0, keepdims=True) * inv_cnt            # (1, C)
        var = jnp.sum(ss, axis=0, keepdims=True) * inv_cnt - mean * mean
        scale = gamma * jax.lax.rsqrt(var + BN_EPS)                   # (1, C)
        shift = beta - mean * scale
        h = x * tile_lanes(scale, L) + tile_lanes(shift, L)
        return jnp.where(h > 0, h, LRELU_SLOPE * h)

    noise = noise_ref[...].astype(bf16)

    # --- FC: one MXU matmul straight into the lane-packed layout (n, L0*C0) ---
    x = jnp.dot(noise, w_ref[ROW_FC:ROW_A1, :],
                preferred_element_type=f32) + vec_ref[0:1, :]

    # --- stage 1: BN(C0) -> LReLU -> ConvT(C0 -> C1) as one banded matmul ---
    h = bn_lrelu(x, L0, C0, vec_ref[4:5, 0:C0], vec_ref[5:6, 0:C0])
    x = jnp.dot(h.astype(bf16), w_ref[ROW_A1:ROW_A2, :],
                preferred_element_type=f32) + vec_ref[1:2, :]

    # --- stage 2: BN(C1) -> LReLU -> ConvT(C1 -> C2) ---
    h = bn_lrelu(x, 2 * L0, C1, vec_ref[6:7, 0:C1], vec_ref[7:8, 0:C1])
    x = jnp.dot(h.astype(bf16), w_ref[ROW_A2:ROW_A3, :],
                preferred_element_type=f32) + vec_ref[2:3, :]

    # --- stage 3: BN(C2) -> LReLU -> ConvT(C2 -> input_dim) -> Sigmoid ---
    h = bn_lrelu(x, 4 * L0, C2, vec_ref[8:9, 0:C2], vec_ref[9:10, 0:C2])
    x = jnp.dot(h.astype(bf16), w_ref[ROW_A3:W_ROWS, 0:LC3],
                preferred_element_type=f32) + vec_ref[3:4, 0:LC3]

    # Already the lane-dense output: out[b, m*INPUT_DIM + c] == output[b, m, c].
    out_ref[...] = jax.nn.sigmoid(x)


# ------------------------------- Python wrapper --------------------------------------
@jax.jit
def generator_forward(noise, w_slab, vec_slab):
    """Pallas implementation of Generator.forward(noise, conditioning_vars=None)."""
    n = noise.shape[0]
    flat = pl.pallas_call(
        _generator_kernel,
        out_shape=jax.ShapeDtypeStruct((n, LC3), jnp.float32),
        in_specs=[_VMEM, _VMEM, _VMEM],
        out_specs=_VMEM,
        # BATCH is tiny -> grid-less; a ("parallel",) batch grid is only worth it on
        # v7x at much larger N.
    )(noise, w_slab, vec_slab)
    # Free reshape: kernel output is already (batch, position, channel) row-major,
    # i.e. the torch x.permute(0, 2, 1) result.
    x = flat.reshape(n, 8 * L0, INPUT_DIM)
    return x, None, None


# ------------------------------- Parameters -----------------------------------------
def _bf16_representable(x):
    return x.astype(jnp.bfloat16).astype(jnp.float32)


def init_params(key):
    ks = jax.random.split(key, 14)
    f = L0 * C0
    # MXU-operand params (fc_w, w*_t) are made bf16-representable so the in-kernel
    # bf16 cast is lossless vs. the f32 reference.
    p = {
        "fc_w": _bf16_representable(0.1 * jax.random.normal(ks[0], (NOISE_DIM, f), jnp.float32)),
        "fc_b": 0.1 * jax.random.normal(ks[1], (1, f), jnp.float32),
        "bn0_g": 1.0 + 0.1 * jax.random.normal(ks[2], (1, C0), jnp.float32),
        "bn0_b": 0.1 * jax.random.normal(ks[3], (1, C0), jnp.float32),
        "w1_t": _bf16_representable(0.1 * jax.random.normal(ks[4], (C0, C1, 4), jnp.float32)),
        "cb1": 0.1 * jax.random.normal(ks[5], (1, C1), jnp.float32),
        "bn1_g": 1.0 + 0.1 * jax.random.normal(ks[6], (1, C1), jnp.float32),
        "bn1_b": 0.1 * jax.random.normal(ks[7], (1, C1), jnp.float32),
        "w2_t": _bf16_representable(0.1 * jax.random.normal(ks[8], (C1, C2, 4), jnp.float32)),
        "cb2": 0.1 * jax.random.normal(ks[9], (1, C2), jnp.float32),
        "bn2_g": 1.0 + 0.1 * jax.random.normal(ks[10], (1, C2), jnp.float32),
        "bn2_b": 0.1 * jax.random.normal(ks[11], (1, C2), jnp.float32),
        "w3_t": _bf16_representable(0.1 * jax.random.normal(ks[12], (C2, INPUT_DIM, 4), jnp.float32)),
        "cb3": 0.1 * jax.random.normal(ks[13], (1, INPUT_DIM), jnp.float32),
    }
    return p


def _conv_transpose_band_matrix(w, l_in):
    """ConvTranspose1d(k=4,s=2,p=1) as a (l_in*Ci, 2*l_in*Co) block-banded matrix.

    out[:, j*Co:(j+1)*Co] += in[:, m*Ci:(m+1)*Ci] @ w[:, :, j - 2m + 1]
    (torch weight layout (Ci, Co, K); out-of-range taps are zero blocks).
    """
    ci, co, k = w.shape
    l_out = 2 * l_in
    a = np.zeros((l_in * ci, l_out * co), np.float32)
    for m in range(l_in):
        for kk in range(k):
            j = 2 * m - 1 + kk
            if 0 <= j < l_out:
                a[m * ci:(m + 1) * ci, j * co:(j + 1) * co] = w[:, :, kk]
    return a


def pack_params(p):
    """One-time host-side packing into (bf16 weight slab, f32 vector slab)."""
    # FC pre-permuted: torch fc column f = c*L0 + l  ->  kernel column l*C0 + c.
    fc_w = np.asarray(p["fc_w"])
    fcw_packed = fc_w.reshape(NOISE_DIM, C0, L0).transpose(0, 2, 1).reshape(NOISE_DIM, LC0)
    fcb_packed = np.asarray(p["fc_b"]).reshape(C0, L0).T.reshape(LC0)

    a1 = _conv_transpose_band_matrix(np.asarray(p["w1_t"]), L0)        # (256, 256)
    a2 = _conv_transpose_band_matrix(np.asarray(p["w2_t"]), 2 * L0)    # (256, 256)
    a3 = _conv_transpose_band_matrix(np.asarray(p["w3_t"]), 4 * L0)    # (256, 128)
    a3p = np.zeros((LC2, LC0), np.float32)
    a3p[:, :LC3] = a3

    w_slab = np.concatenate([fcw_packed, a1, a2, a3p], axis=0)          # (800, 256)
    assert w_slab.shape == (W_ROWS, LC0)

    vec = np.zeros((10, LC0), np.float32)
    vec[0, :LC0] = fcb_packed
    vec[1, :LC1] = np.tile(np.asarray(p["cb1"])[0], 2 * L0)   # conv bias, position-major
    vec[2, :LC2] = np.tile(np.asarray(p["cb2"])[0], 4 * L0)
    vec[3, :LC3] = np.tile(np.asarray(p["cb3"])[0], 8 * L0)
    vec[4, :C0] = np.asarray(p["bn0_g"])[0]
    vec[5, :C0] = np.asarray(p["bn0_b"])[0]
    vec[6, :C1] = np.asarray(p["bn1_g"])[0]
    vec[7, :C1] = np.asarray(p["bn1_b"])[0]
    vec[8, :C2] = np.asarray(p["bn2_g"])[0]
    vec[9, :C2] = np.asarray(p["bn2_b"])[0]

    return (jnp.asarray(w_slab, dtype=jnp.bfloat16),
            jnp.asarray(vec, dtype=jnp.float32))


# -------------------------- Plain-JAX reference (NCL, torch-like) -------------------
def reference_forward(noise, p):
    hi = jax.lax.Precision.HIGHEST

    def bn(x, g, b):  # x: (N, C, L), training-mode BatchNorm1d
        m = jnp.mean(x, axis=(0, 2), keepdims=True)
        v = jnp.mean((x - m) ** 2, axis=(0, 2), keepdims=True)
        return (x - m) / jnp.sqrt(v + BN_EPS) * g.reshape(1, -1, 1) + b.reshape(1, -1, 1)

    def lrelu(x):
        return jnp.where(x > 0, x, LRELU_SLOPE * x)

    def conv_t(x, w, b):  # ConvTranspose1d(k=4, s=2, p=1); w: (Ci, Co, K)
        w_f = jnp.transpose(jnp.flip(w, axis=2), (1, 0, 2))               # (Co, Ci, K)
        y = jax.lax.conv_general_dilated(
            x, w_f, window_strides=(1,), padding=[(2, 2)],
            lhs_dilation=(2,), rhs_dilation=(1,),
            dimension_numbers=("NCH", "OIH", "NCH"), precision=hi)
        return y + b.reshape(1, -1, 1)

    x = jnp.dot(noise, p["fc_w"], precision=hi) + p["fc_b"][0]
    x = x.reshape(noise.shape[0], C0, L0)
    x = conv_t(lrelu(bn(x, p["bn0_g"], p["bn0_b"])), p["w1_t"], p["cb1"])
    x = conv_t(lrelu(bn(x, p["bn1_g"], p["bn1_b"])), p["w2_t"], p["cb2"])
    x = conv_t(lrelu(bn(x, p["bn2_g"], p["bn2_b"])), p["w3_t"], p["cb3"])
    x = jax.nn.sigmoid(x)
    return jnp.transpose(x, (0, 2, 1))


# --------------------------------------- Main ---------------------------------------
if __name__ == "__main__":
    key = jax.random.PRNGKey(0)
    pkey, nkey = jax.random.split(key)
    params = init_params(pkey)
    w_slab, vec_slab = pack_params(params)

    noise = jax.random.normal(nkey, (BATCH, NOISE_DIM), jnp.float32)
    noise = _bf16_representable(noise)   # makes the in-kernel bf16 MXU cast lossless

    out, mu, logvar = generator_forward(noise, w_slab, vec_slab)
    jax.block_until_ready(out)

    assert out.shape == (BATCH, FINAL_WINDOW_LENGTH, INPUT_DIM), out.shape
    assert mu is None and logvar is None

    ref = reference_forward(noise, params)
    np.testing.assert_allclose(np.asarray(out), np.asarray(ref), atol=5e-3, rtol=5e-3)

    print("KERNEL_OK")
</pallas_src>

<mosaic_0001>
module attributes {stable_mosaic.version = 11 : i64} {
  func.func @_generator_kernel(%arg0: memref<4x32xf32, #tpu.memory_space<vmem>>, %arg1: memref<800x256xbf16, #tpu.memory_space<vmem>>, %arg2: memref<10x256xf32, #tpu.memory_space<vmem>>, %arg3: memref<4x128xf32, #tpu.memory_space<vmem>>) attributes {dimension_semantics = [], scalar_prefetch = 0 : i64, scratch_operands = 0 : i64, tpu.core_type = #tpu.core_type<tc>} {
    %c0 = arith.constant 0 : index
    %c0_0 = arith.constant 0 : index
    %0 = vector.load %arg0[%c0, %c0_0] : memref<4x32xf32, #tpu.memory_space<vmem>>, vector<4x32xf32>
    %1 = arith.truncf %0 : vector<4x32xf32> to vector<4x32xbf16>
    %c0_1 = arith.constant 0 : index
    %c0_2 = arith.constant 0 : index
    %2 = vector.load %arg1[%c0_1, %c0_2] : memref<800x256xbf16, #tpu.memory_space<vmem>>, vector<32x256xbf16>
    %cst = arith.constant dense<0.000000e+00> : vector<4x256xf32>
    %3 = tpu.matmul %1, %2, %cst {dimension_numbers = #tpu.dot_dimension_numbers<[1], [0], [0], [1], [0, 0, 1, 1], [], []>} : vector<4x32xbf16>, vector<32x256xbf16>, vector<4x256xf32> -> vector<4x256xf32>
    %c0_3 = arith.constant 0 : index
    %c0_4 = arith.constant 0 : index
    %4 = vector.load %arg2[%c0_3, %c0_4] : memref<10x256xf32, #tpu.memory_space<vmem>>, vector<1x256xf32>
    %5 = vector.broadcast %4 : vector<1x256xf32> to vector<4x256xf32>
    %6 = arith.addf %3, %5 : vector<4x256xf32>
    %c4 = arith.constant 4 : index
    %c0_5 = arith.constant 0 : index
    %7 = vector.load %arg2[%c4, %c0_5] : memref<10x256xf32, #tpu.memory_space<vmem>>, vector<1x64xf32>
    %c5 = arith.constant 5 : index
    %c0_6 = arith.constant 0 : index
    %8 = vector.load %arg2[%c5, %c0_6] : memref<10x256xf32, #tpu.memory_space<vmem>>, vector<1x64xf32>
    %9 = arith.mulf %6, %6 : vector<4x256xf32>
    %10 = vector.extract_strided_slice %6 {offsets = [0, 0], sizes = [4, 128], strides = [1, 1]} : vector<4x256xf32> to vector<4x128xf32>
    %11 = vector.extract_strided_slice %6 {offsets = [0, 128], sizes = [4, 128], strides = [1, 1]} : vector<4x256xf32> to vector<4x128xf32>
    %12 = arith.addf %10, %11 : vector<4x128xf32>
    %13 = vector.extract_strided_slice %9 {offsets = [0, 0], sizes = [4, 128], strides = [1, 1]} : vector<4x256xf32> to vector<4x128xf32>
    %14 = vector.extract_strided_slice %9 {offsets = [0, 128], sizes = [4, 128], strides = [1, 1]} : vector<4x256xf32> to vector<4x128xf32>
    %15 = arith.addf %13, %14 : vector<4x128xf32>
    %16 = vector.extract_strided_slice %12 {offsets = [0, 0], sizes = [4, 64], strides = [1, 1]} : vector<4x128xf32> to vector<4x64xf32>
    %17 = vector.extract_strided_slice %12 {offsets = [0, 64], sizes = [4, 64], strides = [1, 1]} : vector<4x128xf32> to vector<4x64xf32>
    %18 = arith.addf %16, %17 : vector<4x64xf32>
    %19 = vector.extract_strided_slice %15 {offsets = [0, 0], sizes = [4, 64], strides = [1, 1]} : vector<4x128xf32> to vector<4x64xf32>
    %20 = vector.extract_strided_slice %15 {offsets = [0, 64], sizes = [4, 64], strides = [1, 1]} : vector<4x128xf32> to vector<4x64xf32>
    %21 = arith.addf %19, %20 : vector<4x64xf32>
    %cst_7 = arith.constant dense<0.000000e+00> : vector<64xf32>
    %22 = vector.multi_reduction <add>, %18, %cst_7 [0] : vector<4x64xf32> to vector<64xf32>
    %23 = vector.shape_cast %22 : vector<64xf32> to vector<1x64xf32>
    %cst_8 = arith.constant 6.250000e-02 : f32
    %24 = vector.broadcast %cst_8 : f32 to vector<1x64xf32>
    %25 = arith.mulf %23, %24 : vector<1x64xf32>
    %cst_9 = arith.constant dense<0.000000e+00> : vector<64xf32>
    %26 = vector.multi_reduction <add>, %21, %cst_9 [0] : vector<4x64xf32> to vector<64xf32>
    %27 = vector.shape_cast %26 : vector<64xf32> to vector<1x64xf32>
    %cst_10 = arith.constant 6.250000e-02 : f32
    %28 = vector.broadcast %cst_10 : f32 to vector<1x64xf32>
    %29 = arith.mulf %27, %28 : vector<1x64xf32>
    %30 = arith.mulf %25, %25 : vector<1x64xf32>
    %31 = arith.subf %29, %30 : vector<1x64xf32>
    %cst_11 = arith.constant 9.99999974E-6 : f32
    %32 = vector.broadcast %cst_11 : f32 to vector<1x64xf32>
    %33 = arith.addf %31, %32 : vector<1x64xf32>
    %34 = math.rsqrt %33 : vector<1x64xf32>
    %35 = arith.mulf %7, %34 : vector<1x64xf32>
    %36 = arith.mulf %25, %35 : vector<1x64xf32>
    %37 = arith.subf %8, %36 : vector<1x64xf32>
    %38 = tpu.concatenate %35, %35 in 1 : vector<1x64xf32>, vector<1x64xf32> -> vector<1x128xf32>
    %39 = tpu.concatenate %38, %38 in 1 : vector<1x128xf32>, vector<1x128xf32> -> vector<1x256xf32>
    %40 = vector.broadcast %39 : vector<1x256xf32> to vector<4x256xf32>
    %41 = arith.mulf %6, %40 : vector<4x256xf32>
    %42 = tpu.concatenate %37, %37 in 1 : vector<1x64xf32>, vector<1x64xf32> -> vector<1x128xf32>
    %43 = tpu.concatenate %42, %42 in 1 : vector<1x128xf32>, vector<1x128xf32> -> vector<1x256xf32>
    %44 = vector.broadcast %43 : vector<1x256xf32> to vector<4x256xf32>
    %45 = arith.addf %41, %44 : vector<4x256xf32>
    %cst_12 = arith.constant 0.000000e+00 : f32
    %46 = vector.broadcast %cst_12 : f32 to vector<4x256xf32>
    %47 = arith.cmpf ogt, %45, %46 : vector<4x256xf32>
    %cst_13 = arith.constant 2.000000e-01 : f32
    %48 = vector.broadcast %cst_13 : f32 to vector<4x256xf32>
    %49 = arith.mulf %48, %45 : vector<4x256xf32>
    %50 = arith.select %47, %45, %49 : vector<4x256xi1>, vector<4x256xf32>
    %51 = arith.truncf %50 : vector<4x256xf32> to vector<4x256xbf16>
    %c32 = arith.constant 32 : index
    %c0_14 = arith.constant 0 : index
    %52 = vector.load %arg1[%c32, %c0_14] : memref<800x256xbf16, #tpu.memory_space<vmem>>, vector<256x256xbf16>
    %cst_15 = arith.constant dense<0.000000e+00> : vector<4x256xf32>
    %53 = tpu.matmul %51, %52, %cst_15 {dimension_numbers = #tpu.dot_dimension_numbers<[1], [0], [0], [1], [0, 0, 1, 1], [], []>} : vector<4x256xbf16>, vector<256x256xbf16>, vector<4x256xf32> -> vector<4x256xf32>
    %c1 = arith.constant 1 : index
    %c0_16 = arith.constant 0 : index
    %54 = vector.load %arg2[%c1, %c0_16] : memref<10x256xf32, #tpu.memory_space<vmem>>, vector<1x256xf32>
    %55 = vector.broadcast %54 : vector<1x256xf32> to vector<4x256xf32>
    %56 = arith.addf %53, %55 : vector<4x256xf32>
    %c6 = arith.constant 6 : index
    %c0_17 = arith.constant 0 : index
    %57 = vector.load %arg2[%c6, %c0_17] : memref<10x256xf32, #tpu.memory_space<vmem>>, vector<1x32xf32>
    %c7 = arith.constant 7 : index
    %c0_18 = arith.constant 0 : index
    %58 = vector.load %arg2[%c7, %c0_18] : memref<10x256xf32, #tpu.memory_space<vmem>>, vector<1x32xf32>
    %59 = arith.mulf %56, %56 : vector<4x256xf32>
    %60 = vector.extract_strided_slice %56 {offsets = [0, 0], sizes = [4, 128], strides = [1, 1]} : vector<4x256xf32> to vector<4x128xf32>
    %61 = vector.extract_strided_slice %56 {offsets = [0, 128], sizes = [4, 128], strides = [1, 1]} : vector<4x256xf32> to vector<4x128xf32>
    %62 = arith.addf %60, %61 : vector<4x128xf32>
    %63 = vector.extract_strided_slice %59 {offsets = [0, 0], sizes = [4, 128], strides = [1, 1]} : vector<4x256xf32> to vector<4x128xf32>
    %64 = vector.extract_strided_slice %59 {offsets = [0, 128], sizes = [4, 128], strides = [1, 1]} : vector<4x256xf32> to vector<4x128xf32>
    %65 = arith.addf %63, %64 : vector<4x128xf32>
    %66 = vector.extract_strided_slice %62 {offsets = [0, 0], sizes = [4, 64], strides = [1, 1]} : vector<4x128xf32> to vector<4x64xf32>
    %67 = vector.extract_strided_slice %62 {offsets = [0, 64], sizes = [4, 64], strides = [1, 1]} : vector<4x128xf32> to vector<4x64xf32>
    %68 = arith.addf %66, %67 : vector<4x64xf32>
    %69 = vector.extract_strided_slice %65 {offsets = [0, 0], sizes = [4, 64], strides = [1, 1]} : vector<4x128xf32> to vector<4x64xf32>
    %70 = vector.extract_strided_slice %65 {offsets = [0, 64], sizes = [4, 64], strides = [1, 1]} : vector<4x128xf32> to vector<4x64xf32>
    %71 = arith.addf %69, %70 : vector<4x64xf32>
    %72 = vector.extract_strided_slice %68 {offsets = [0, 0], sizes = [4, 32], strides = [1, 1]} : vector<4x64xf32> to vector<4x32xf32>
    %73 = vector.extract_strided_slice %68 {offsets = [0, 32], sizes = [4, 32], strides = [1, 1]} : vector<4x64xf32> to vector<4x32xf32>
    %74 = arith.addf %72, %73 : vector<4x32xf32>
    %75 = vector.extract_strided_slice %71 {offsets = [0, 0], sizes = [4, 32], strides = [1, 1]} : vector<4x64xf32> to vector<4x32xf32>
    %76 = vector.extract_strided_slice %71 {offsets = [0, 32], sizes = [4, 32], strides = [1, 1]} : vector<4x64xf32> to vector<4x32xf32>
    %77 = arith.addf %75, %76 : vector<4x32xf32>
    %cst_19 = arith.constant dense<0.000000e+00> : vector<32xf32>
    %78 = vector.multi_reduction <add>, %74, %cst_19 [0] : vector<4x32xf32> to vector<32xf32>
    %79 = vector.shape_cast %78 : vector<32xf32> to vector<1x32xf32>
    %cst_20 = arith.constant 3.125000e-02 : f32
    %80 = vector.broadcast %cst_20 : f32 to vector<1x32xf32>
    %81 = arith.mulf %79, %80 : vector<1x32xf32>
    %cst_21 = arith.constant dense<0.000000e+00> : vector<32xf32>
    %82 = vector.multi_reduction <add>, %77, %cst_21 [0] : vector<4x32xf32> to vector<32xf32>
    %83 = vector.shape_cast %82 : vector<32xf32> to vector<1x32xf32>
    %cst_22 = arith.constant 3.125000e-02 : f32
    %84 = vector.broadcast %cst_22 : f32 to vector<1x32xf32>
    %85 = arith.mulf %83, %84 : vector<1x32xf32>
    %86 = arith.mulf %81, %81 : vector<1x32xf32>
    %87 = arith.subf %85, %86 : vector<1x32xf32>
    %cst_23 = arith.constant 9.99999974E-6 : f32
    %88 = vector.broadcast %cst_23 : f32 to vector<1x32xf32>
    %89 = arith.addf %87, %88 : vector<1x32xf32>
    %90 = math.rsqrt %89 : vector<1x32xf32>
    %91 = arith.mulf %57, %90 : vector<1x32xf32>
    %92 = arith.mulf %81, %91 : vector<1x32xf32>
    %93 = arith.subf %58, %92 : vector<1x32xf32>
    %94 = tpu.concatenate %91, %91 in 1 : vector<1x32xf32>, vector<1x32xf32> -> vector<1x64xf32>
    %95 = tpu.concatenate %94, %94 in 1 : vector<1x64xf32>, vector<1x64xf32> -> vector<1x128xf32>
    %96 = tpu.concatenate %95, %95 in 1 : vector<1x128xf32>, vector<1x128xf32> -> vector<1x256xf32>
    %97 = vector.broadcast %96 : vector<1x256xf32> to vector<4x256xf32>
    %98 = arith.mulf %56, %97 : vector<4x256xf32>
    %99 = tpu.concatenate %93, %93 in 1 : vector<1x32xf32>, vector<1x32xf32> -> vector<1x64xf32>
    %100 = tpu.concatenate %99, %99 in 1 : vector<1x64xf32>, vector<1x64xf32> -> vector<1x128xf32>
    %101 = tpu.concatenate %100, %100 in 1 : vector<1x128xf32>, vector<1x128xf32> -> vector<1x256xf32>
    %102 = vector.broadcast %101 : vector<1x256xf32> to vector<4x256xf32>
    %103 = arith.addf %98, %102 : vector<4x256xf32>
    %cst_24 = arith.constant 0.000000e+00 : f32
    %104 = vector.broadcast %cst_24 : f32 to vector<4x256xf32>
    %105 = arith.cmpf ogt, %103, %104 : vector<4x256xf32>
    %cst_25 = arith.constant 2.000000e-01 : f32
    %106 = vector.broadcast %cst_25 : f32 to vector<4x256xf32>
    %107 = arith.mulf %106, %103 : vector<4x256xf32>
    %108 = arith.select %105, %103, %107 : vector<4x256xi1>, vector<4x256xf32>
    %109 = arith.truncf %108 : vector<4x256xf32> to vector<4x256xbf16>
    %c288 = arith.constant 288 : index
    %c0_26 = arith.constant 0 : index
    %110 = vector.load %arg1[%c288, %c0_26] : memref<800x256xbf16, #tpu.memory_space<vmem>>, vector<256x256xbf16>
    %cst_27 = arith.constant dense<0.000000e+00> : vector<4x256xf32>
    %111 = tpu.matmul %109, %110, %cst_27 {dimension_numbers = #tpu.dot_dimension_numbers<[1], [0], [0], [1], [0, 0, 1, 1], [], []>} : vector<4x256xbf16>, vector<256x256xbf16>, vector<4x256xf32> -> vector<4x256xf32>
    %c2 = arith.constant 2 : index
    %c0_28 = arith.constant 0 : index
    %112 = vector.load %arg2[%c2, %c0_28] : memref<10x256xf32, #tpu.memory_space<vmem>>, vector<1x256xf32>
    %113 = vector.broadcast %112 : vector<1x256xf32> to vector<4x256xf32>
    %114 = arith.addf %111, %113 : vector<4x256xf32>
    %c8 = arith.constant 8 : index
    %c0_29 = arith.constant 0 : index
    %115 = vector.load %arg2[%c8, %c0_29] : memref<10x256xf32, #tpu.memory_space<vmem>>, vector<1x16xf32>
    %c9 = arith.constant 9 : index
    %c0_30 = arith.constant 0 : index
    %116 = vector.load %arg2[%c9, %c0_30] : memref<10x256xf32, #tpu.memory_space<vmem>>, vector<1x16xf32>
    %117 = arith.mulf %114, %114 : vector<4x256xf32>
    %118 = vector.extract_strided_slice %114 {offsets = [0, 0], sizes = [4, 128], strides = [1, 1]} : vector<4x256xf32> to vector<4x128xf32>
    %119 = vector.extract_strided_slice %114 {offsets = [0, 128], sizes = [4, 128], strides = [1, 1]} : vector<4x256xf32> to vector<4x128xf32>
    %120 = arith.addf %118, %119 : vector<4x128xf32>
    %121 = vector.extract_strided_slice %117 {offsets = [0, 0], sizes = [4, 128], strides = [1, 1]} : vector<4x256xf32> to vector<4x128xf32>
    %122 = vector.extract_strided_slice %117 {offsets = [0, 128], sizes = [4, 128], strides = [1, 1]} : vector<4x256xf32> to vector<4x128xf32>
    %123 = arith.addf %121, %122 : vector<4x128xf32>
    %124 = vector.extract_strided_slice %120 {offsets = [0, 0], sizes = [4, 64], strides = [1, 1]} : vector<4x128xf32> to vector<4x64xf32>
    %125 = vector.extract_strided_slice %120 {offsets = [0, 64], sizes = [4, 64], strides = [1, 1]} : vector<4x128xf32> to vector<4x64xf32>
    %126 = arith.addf %124, %125 : vector<4x64xf32>
    %127 = vector.extract_strided_slice %123 {offsets = [0, 0], sizes = [4, 64], strides = [1, 1]} : vector<4x128xf32> to vector<4x64xf32>
    %128 = vector.extract_strided_slice %123 {offsets = [0, 64], sizes = [4, 64], strides = [1, 1]} : vector<4x128xf32> to vector<4x64xf32>
    %129 = arith.addf %127, %128 : vector<4x64xf32>
    %130 = vector.extract_strided_slice %126 {offsets = [0, 0], sizes = [4, 32], strides = [1, 1]} : vector<4x64xf32> to vector<4x32xf32>
    %131 = vector.extract_strided_slice %126 {offsets = [0, 32], sizes = [4, 32], strides = [1, 1]} : vector<4x64xf32> to vector<4x32xf32>
    %132 = arith.addf %130, %131 : vector<4x32xf32>
    %133 = vector.extract_strided_slice %129 {offsets = [0, 0], sizes = [4, 32], strides = [1, 1]} : vector<4x64xf32> to vector<4x32xf32>
    %134 = vector.extract_strided_slice %129 {offsets = [0, 32], sizes = [4, 32], strides = [1, 1]} : vector<4x64xf32> to vector<4x32xf32>
    %135 = arith.addf %133, %134 : vector<4x32xf32>
    %136 = vector.extract_strided_slice %132 {offsets = [0, 0], sizes = [4, 16], strides = [1, 1]} : vector<4x32xf32> to vector<4x16xf32>
    %137 = vector.extract_strided_slice %132 {offsets = [0, 16], sizes = [4, 16], strides = [1, 1]} : vector<4x32xf32> to vector<4x16xf32>
    %138 = arith.addf %136, %137 : vector<4x16xf32>
    %139 = vector.extract_strided_slice %135 {offsets = [0, 0], sizes = [4, 16], strides = [1, 1]} : vector<4x32xf32> to vector<4x16xf32>
    %140 = vector.extract_strided_slice %135 {offsets = [0, 16], sizes = [4, 16], strides = [1, 1]} : vector<4x32xf32> to vector<4x16xf32>
    %141 = arith.addf %139, %140 : vector<4x16xf32>
    %cst_31 = arith.constant dense<0.000000e+00> : vector<16xf32>
    %142 = vector.multi_reduction <add>, %138, %cst_31 [0] : vector<4x16xf32> to vector<16xf32>
    %143 = vector.shape_cast %142 : vector<16xf32> to vector<1x16xf32>
    %cst_32 = arith.constant 1.562500e-02 : f32
    %144 = vector.broadcast %cst_32 : f32 to vector<1x16xf32>
    %145 = arith.mulf %143, %144 : vector<1x16xf32>
    %cst_33 = arith.constant dense<0.000000e+00> : vector<16xf32>
    %146 = vector.multi_reduction <add>, %141, %cst_33 [0] : vector<4x16xf32> to vector<16xf32>
    %147 = vector.shape_cast %146 : vector<16xf32> to vector<1x16xf32>
    %cst_34 = arith.constant 1.562500e-02 : f32
    %148 = vector.broadcast %cst_34 : f32 to vector<1x16xf32>
    %149 = arith.mulf %147, %148 : vector<1x16xf32>
    %150 = arith.mulf %145, %145 : vector<1x16xf32>
    %151 = arith.subf %149, %150 : vector<1x16xf32>
    %cst_35 = arith.constant 9.99999974E-6 : f32
    %152 = vector.broadcast %cst_35 : f32 to vector<1x16xf32>
    %153 = arith.addf %151, %152 : vector<1x16xf32>
    %154 = math.rsqrt %153 : vector<1x16xf32>
    %155 = arith.mulf %115, %154 : vector<1x16xf32>
    %156 = arith.mulf %145, %155 : vector<1x16xf32>
    %157 = arith.subf %116, %156 : vector<1x16xf32>
    %158 = tpu.concatenate %155, %155 in 1 : vector<1x16xf32>, vector<1x16xf32> -> vector<1x32xf32>
    %159 = tpu.concatenate %158, %158 in 1 : vector<1x32xf32>, vector<1x32xf32> -> vector<1x64xf32>
    %160 = tpu.concatenate %159, %159 in 1 : vector<1x64xf32>, vector<1x64xf32> -> vector<1x128xf32>
    %161 = tpu.concatenate %160, %160 in 1 : vector<1x128xf32>, vector<1x128xf32> -> vector<1x256xf32>
    %162 = vector.broadcast %161 : vector<1x256xf32> to vector<4x256xf32>
    %163 = arith.mulf %114, %162 : vector<4x256xf32>
    %164 = tpu.concatenate %157, %157 in 1 : vector<1x16xf32>, vector<1x16xf32> -> vector<1x32xf32>
    %165 = tpu.concatenate %164, %164 in 1 : vector<1x32xf32>, vector<1x32xf32> -> vector<1x64xf32>
    %166 = tpu.concatenate %165, %165 in 1 : vector<1x64xf32>, vector<1x64xf32> -> vector<1x128xf32>
    %167 = tpu.concatenate %166, %166 in 1 : vector<1x128xf32>, vector<1x128xf32> -> vector<1x256xf32>
    %168 = vector.broadcast %167 : vector<1x256xf32> to vector<4x256xf32>
    %169 = arith.addf %163, %168 : vector<4x256xf32>
    %cst_36 = arith.constant 0.000000e+00 : f32
    %170 = vector.broadcast %cst_36 : f32 to vector<4x256xf32>
    %171 = arith.cmpf ogt, %169, %170 : vector<4x256xf32>
    %cst_37 = arith.constant 2.000000e-01 : f32
    %172 = vector.broadcast %cst_37 : f32 to vector<4x256xf32>
    %173 = arith.mulf %172, %169 : vector<4x256xf32>
    %174 = arith.select %171, %169, %173 : vector<4x256xi1>, vector<4x256xf32>
    %175 = arith.truncf %174 : vector<4x256xf32> to vector<4x256xbf16>
    %c544 = arith.constant 544 : index
    %c0_38 = arith.constant 0 : index
    %176 = vector.load %arg1[%c544, %c0_38] : memref<800x256xbf16, #tpu.memory_space<vmem>>, vector<256x128xbf16>
    %cst_39 = arith.constant dense<0.000000e+00> : vector<4x128xf32>
    %177 = tpu.matmul %175, %176, %cst_39 {dimension_numbers = #tpu.dot_dimension_numbers<[1], [0], [0], [1], [0, 0, 1, 1], [], []>} : vector<4x256xbf16>, vector<256x128xbf16>, vector<4x128xf32> -> vector<4x128xf32>
    %c3 = arith.constant 3 : index
    %c0_40 = arith.constant 0 : index
    %178 = vector.load %arg2[%c3, %c0_40] : memref<10x256xf32, #tpu.memory_space<vmem>>, vector<1x128xf32>
    %179 = vector.broadcast %178 : vector<1x128xf32> to vector<4x128xf32>
    %180 = arith.addf %177, %179 : vector<4x128xf32>
    %181 = arith.negf %180 : vector<4x128xf32>
    %182 = math.exp %181 : vector<4x128xf32>
    %cst_41 = arith.constant 1.000000e+00 : f32
    %183 = vector.broadcast %cst_41 : f32 to vector<4x128xf32>
    %184 = arith.addf %183, %182 : vector<4x128xf32>
    %185 = arith.divf %183, %184 : vector<4x128xf32>
    %c0_42 = arith.constant 0 : index
    %c0_43 = arith.constant 0 : index
    %186 = vector.load %arg3[%c0_42, %c0_43] : memref<4x128xf32, #tpu.memory_space<vmem>>, vector<4x128xf32>
    tpu.vector_store %arg3[%c0_42, %c0_43], %185 {strides = array<i32>} : memref<4x128xf32, #tpu.memory_space<vmem>>, vector<4x128xf32>,
    return
  }
}

</mosaic_0001>

<llo_original>
// kernel: generator_forward.1
$region0: #{generator_forward.1}
  #allocation0 [shape = 'u32[]', space=smem, size = 0x4, offset = 0x4, fixed_abs, tag = 'smem constant byte address 0x4 - core index']
  #allocation1 [shape = 'u32[144,128]{1,0:T(1,128)}', space=vmem, size = 0x12000, scoped, tag = 'internal scratch']
  %s0 = inlined_call_operand.hbm [shape: f32[4,32], index: 0, kind: input, shape index: {}]
  %s1 = inlined_call_operand.hbm [shape: bf16[800,256], index: 1, kind: input, shape index: {}]
  %s2 = inlined_call_operand.hbm [shape: f32[10,256], index: 2, kind: input, shape index: {}]
  %s3 = inlined_call_operand.vmem [shape: f32[4,128], index: 3, kind: output, shape index: {}]
  %s4 = sld [smem:[#allocation0]]
  $region34: #{generator_forward.1} parent=0
    _
  %s6 = ssub.s32 1, %s4
  %s7 = scalar_select 0, %s6, %s4
  $region1: #{generator_forward.1} parent=0
    #allocation2 [shape = 'u8[2048]{0}', space=vmem, size = 0x800, scoped, tag = 'input window, operand 0, single buffered']
    #allocation3 [shape = 's32[1]{0}', space=sflag, size = 0x4, scoped, tag = 'scoped memory for generator_forward.1']
    #allocation4 [shape = 'u8[409600]{0}', space=vmem, size = 0x64000, scoped, tag = 'input window, operand 1, single buffered']
    #allocation5 [shape = 's32[1]{0}', space=sflag, size = 0x4, scoped, tag = 'scoped memory for generator_forward.1']
    #allocation6 [shape = 'u8[16384]{0}', space=vmem, size = 0x4000, scoped, tag = 'input window, operand 2, single buffered']
    %8 = vsyncpa [#allocation3], 0
    %9 = vsyncpa [#allocation5], 0
    // Predicated region
    $region2: #{generator_forward.1} parent=1 // pred_check
      _
    $region3: #{generator_forward.1} parent=1 // pred_check_branch
      %11 = sbr.rel (0) target = $region5
    $region4: #{generator_forward.1} parent=1 // pred_region
      %s13 = ssub.s32 64, 64
      %14 = vsyncadd [#allocation3], %s13
      %s16 = sshll.u32 [#allocation2], 4
      %s17 = int_to_ptr.vmem [resolvable:$true] %s16
      %19 = dma.hbm_to_vmem [thread:$0]  %s0, 64, %s17, [#allocation3]
    $region5: #{generator_forward.1} parent=1 // pred_fallthru
      _
    // Predicated region
    $region6: #{generator_forward.1} parent=1 // pred_check
      _
    $region7: #{generator_forward.1} parent=1 // pred_check_branch
      %21 = sbr.rel (0) target = $region9
    $region8: #{generator_forward.1} parent=1 // pred_region
      %s23 = ssub.s32 12800, 12800
      %24 = vsyncadd [#allocation5], %s23
      %s25 = sshll.u32 [#allocation4], 4
      %s26 = int_to_ptr.vmem [resolvable:$true] %s25
      %31 = dma.hbm_to_vmem [thread:$0]  %s1, 12800, %s26, [#allocation5], 128, 128, 8
    $region9: #{generator_forward.1} parent=1 // pred_fallthru
      _
    // Predicated region
    $region10: #{generator_forward.1} parent=1 // pred_check
      _
    $region11: #{generator_forward.1} parent=1 // pred_check_branch
      %33 = sbr.rel (0) target = $region13
    $region12: #{generator_forward.1} parent=1 // pred_region
      %s35 = ssub.s32 512, 512
      %36 = vsyncadd [#allocation5], %s35
      %s37 = sshll.u32 [#allocation6], 4
      %s38 = int_to_ptr.vmem [resolvable:$true] %s37
      %43 = dma.hbm_to_vmem [thread:$0]  %s2, 512, %s38, [#allocation5], 256, 256, 16
    $region13: #{generator_forward.1} parent=1 // pred_fallthru
      _
    // Predicated region
    $region14: #{generator_forward.1} parent=1 // pred_check
      _
    $region15: #{generator_forward.1} parent=1 // pred_check_branch
      %45 = sbr.rel (0) target = $region17
    $region16: #{generator_forward.1} parent=1 // pred_region
      %46 = dma.done [#allocation3], 64
    $region17: #{generator_forward.1} parent=1 // pred_fallthru
      _
    // Predicated region
    $region18: #{generator_forward.1} parent=1 // pred_check
      _
    $region19: #{generator_forward.1} parent=1 // pred_check_branch
      %48 = sbr.rel (0) target = $region21
    $region20: #{generator_forward.1} parent=1 // pred_region
      %49 = dma.done [#allocation5], 12800
    $region21: #{generator_forward.1} parent=1 // pred_fallthru
      _
    // Predicated region
    $region22: #{generator_forward.1} parent=1 // pred_check
      _
    $region23: #{generator_forward.1} parent=1 // pred_check_branch
      %51 = sbr.rel (0) target = $region25
    $region24: #{generator_forward.1} parent=1 // pred_region
      %52 = dma.done [#allocation5], 512
    $region25: #{generator_forward.1} parent=1 // pred_fallthru
      _
    %v54 = vld [vmem:[#allocation2] sm:$0xf]
    %v55 = vpack.c.bf16 %v54, %v54
    %v56 = vld [vmem:[#allocation4] sm:$0xff]
    %v57 = vld [vmem:[#allocation4 + $0x8] sm:$0xff]
    %v58 = vld [vmem:[#allocation4 + $0x10] sm:$0xff]
    %v59 = vld [vmem:[#allocation4 + $0x18] sm:$0xff]
    %v60 = vld [vmem:[#allocation6] ss:$8 sm:$0x3]
    %v62 = vlaneseq
    %v63 = vshrl.u32 %v62, 7
    %v64 = vsub.s32 0, %v63
    %v65 = vrot.slane %v60, %v64
    %v66 = vlaneseq
    %v67 = vshrl.u32 %v66, 7
    %v68 = vsub.s32 1, %v67
    %v69 = vrot.slane %v60, %v68
    %v76 = vunpack.c.l.b16 %v56
    %v77 = vunpack.c.h.b16 %v56
    %v78 = vunpack.c.l.b16 %v57
    %v79 = vunpack.c.h.b16 %v57
    %v80 = vunpack.c.l.b16 %v58
    %v81 = vunpack.c.h.b16 %v58
    %v82 = vunpack.c.l.b16 %v59
    %v83 = vunpack.c.h.b16 %v59
    %v84 = vpack.c.b16 %v78, %v76
    %v85 = vpack.c.b16 %v79, %v77
    %v86 = vpack.c.b16 %v82, %v80
    %v87 = vpack.c.b16 %v83, %v81
    %vm92 = vcmask 261120
    %v94 = vsel %vm92, %v55, 0
    %96 = vmatprep.subr.bf16.mxu0 %v85
    %97 = vmatpush1.bf16.msra.mxu0 %v84
    %98 = vmatprep.subr.bf16.mxu0 %v87
    %99 = vmatpush1.bf16.msra.mxu0 %v86
    %100 = vmatprep.subr.bf16.mxu0 0
    %101 = vmatpush1.bf16.msra.mxu0 0
    %102 = vmatprep.subr.bf16.mxu0 0
    %103 = vmatpush1.bf16.msra.mxu0 0
    %104 = vmatprep.subr.bf16.mxu0 0
    %105 = vmatpush1.bf16.msra.mxu0 0
    %106 = vmatprep.subr.bf16.mxu0 0
    %107 = vmatpush1.bf16.msra.mxu0 0
    %108 = vmatprep.subr.bf16.mxu0 0
    %109 = vmatpush1.bf16.msra.mxu0 0
    %110 = vmatprep.subr.bf16.mxu0 0
    %111 = vmatpush1.bf16.msra.mxu0 0
    %112 = vmatprep.subr.bf16.mxu0 0
    %113 = vmatpush1.bf16.msra.mxu0 0
    %114 = vmatprep.subr.bf16.mxu0 0
    %115 = vmatpush1.bf16.msra.mxu0 0
    %116 = vmatprep.subr.bf16.mxu0 0
    %117 = vmatpush1.bf16.msra.mxu0 0
    %118 = vmatprep.subr.bf16.mxu0 0
    %119 = vmatpush1.bf16.msra.mxu0 0
    %120 = vmatprep.subr.bf16.mxu0 0
    %121 = vmatpush1.bf16.msra.mxu0 0
    %122 = vmatprep.subr.bf16.mxu0 0
    %123 = vmatpush1.bf16.msra.mxu0 0
    %124 = vmatprep.subr.bf16.mxu0 0
    %125 = vmatpush1.bf16.msra.mxu0 0
    %126 = vmatprep.subr.bf16.mxu0 0
    %127 = vmatpush1.bf16.msra.mxu0 0
    %128 = vmatprep.mubr.bf16.mxu0 0
    %129 = vmatmul.mubr.bf16.gmra.mrb[0].mxu0 %v94
    %v130 = vpop.f32.mrb[0].mxu0
    %v131 = vadd.f32 %v65, %v130
    %v132 = vpop.f32.mrb[0].mxu0
    %v133 = vadd.f32 %v69, %v132
    %v134 = vpop.f32.mrb[0].mxu0
    %v135 = vpop.f32.mrb[0].mxu0
    %136 = vdwg.mxu0
    %v137 = vld [vmem:[#allocation6 + $0x4] ss:$0 sm:$0xff]
    %v138 = vld [vmem:[#allocation6 + $0x5] ss:$0 sm:$0xff]
    %v139 = vmul.f32 %v131, %v131
    %v140 = vmul.f32 %v133, %v133
    %v141 = vadd.f32 %v131, %v133
    %v142 = vadd.f32 %v139, %v140
    %144 = vrot.lane.b32.xlu0 %v141, 64
    %v145 = vpop.permute.xlu0 %144
    %v147 = vadd.f32 %v141, %v145
    %149 = vrot.lane.b32.xlu0 %v142, 64
    %v150 = vpop.permute.xlu0 %149
    %v152 = vadd.f32 %v142, %v150
    %vm153 = vcmask 519168
    %v154 = vsel %vm153, %v147, 0.0
    %v155 = vrot.slane %v154, 4
    %v156 = vadd.f32 %v154, %v155
    %v157 = vrot.slane %v156, 2
    %v158 = vadd.f32 %v156, %v157
    %v159 = vrot.slane %v158, 1
    %v160 = vadd.f32 %v158, %v159
    %v161 = vmul.f32 %v160, 0.0625
    %v162 = vsel %vm153, %v152, 0.0
    %v163 = vrot.slane %v162, 4
    %v164 = vadd.f32 %v162, %v163
    %v165 = vrot.slane %v164, 2
    %v166 = vadd.f32 %v164, %v165
    %v167 = vrot.slane %v166, 1
    %v168 = vadd.f32 %v166, %v167
    %v169 = vmul.f32 %v168, 0.0625
    %v170 = vmul.f32 %v161, %v161
    %v171 = vsub.f32 %v169, %v170
    %v172 = vadd.f32 %v171, 1e-05
    %v173 = vrsqrt.pop %v172
    %v174 = vmul.f32 %v137, %v173
    %v175 = vmul.f32 %v161, %v174
    %v176 = vsub.f32 %v138, %v175
    %178 = vrot.lane.b32.xlu0 %v174, 64
    %v179 = vpop.permute.xlu0 %178
    %vm181 = vcmask 523264
    %v182 = vsel %vm181, %v174, %v179
    %v183 = vlaneseq
    %v184 = vshrl.u32 %v183, 7
    %v185 = vsub.s32 0, %v184
    %v186 = vrot.slane %v182, %v185
    %v187 = vmul.f32 %v131, %v186
    %v188 = vmul.f32 %v133, %v186
    %190 = vrot.lane.b32.xlu0 %v176, 64
    %v191 = vpop.permute.xlu0 %190
    %v193 = vsel %vm181, %v176, %v191
    %v194 = vlaneseq
    %v195 = vshrl.u32 %v194, 7
    %v196 = vsub.s32 0, %v195
    %v197 = vrot.slane %v193, %v196
    %v198 = vadd.f32 %v187, %v197
    %v199 = vadd.f32 %v188, %v197
    %vm200 = vcmp.gt.f32.partialorder %v198, 0.0
    %vm201 = vcmp.gt.f32.partialorder %v199, 0.0
    %v202 = vmul.f32 %v198, 0.2
    %v203 = vmul.f32 %v199, 0.2
    %v204 = vsel %vm200, %v198, %v202
    %v205 = vsel %vm201, %v199, %v203
    %v206 = vpack.c.bf16 %v204, %v204
    %v207 = vpack.c.bf16 %v205, %v205
    %v208 = vld [vmem:[#allocation4 + $0x20] sm:$0xff]
    %v209 = vld [vmem:[#allocation4 + $0x28] sm:$0xff]
    %v210 = vld [vmem:[#allocation4 + $0x30] sm:$0xff]
    %v211 = vld [vmem:[#allocation4 + $0x38] sm:$0xff]
    %v212 = vld [vmem:[#allocation4 + $0x40] sm:$0xff]
    %v213 = vld [vmem:[#allocation4 + $0x48] sm:$0xff]
    %v214 = vld [vmem:[#allocation4 + $0x50] sm:$0xff]
    %v215 = vld [vmem:[#allocation4 + $0x58] sm:$0xff]
    %v216 = vld [vmem:[#allocation4 + $0x60] sm:$0xff]
    %v217 = vld [vmem:[#allocation4 + $0x68] sm:$0xff]
    %v218 = vld [vmem:[#allocation4 + $0x70] sm:$0xff]
    %v219 = vld [vmem:[#allocation4 + $0x78] sm:$0xff]
    %v220 = vld [vmem:[#allocation4 + $0x80] sm:$0xff]
    %v221 = vld [vmem:[#allocation4 + $0x88] sm:$0xff]
    %v222 = vld [vmem:[#allocation4 + $0x90] sm:$0xff]
    %v223 = vld [vmem:[#allocation4 + $0x98] sm:$0xff]
    %v224 = vld [vmem:[#allocation4 + $0xa0] sm:$0xff]
    %v225 = vld [vmem:[#allocation4 + $0xa8] sm:$0xff]
    %v226 = vld [vmem:[#allocation4 + $0xb0] sm:$0xff]
    %v227 = vld [vmem:[#allocation4 + $0xb8] sm:$0xff]
    %v228 = vld [vmem:[#allocation4 + $0xc0] sm:$0xff]
    %v229 = vld [vmem:[#allocation4 + $0xc8] sm:$0xff]
    %v230 = vld [vmem:[#allocation4 + $0xd0] sm:$0xff]
    %v231 = vld [vmem:[#allocation4 + $0xd8] sm:$0xff]
    %v232 = vld [vmem:[#allocation4 + $0xe0] sm:$0xff]
    %v233 = vld [vmem:[#allocation4 + $0xe8] sm:$0xff]
    %v234 = vld [vmem:[#allocation4 + $0xf0] sm:$0xff]
    %v235 = vld [vmem:[#allocation4 + $0xf8] sm:$0xff]
    %v236 = vld [vmem:[#allocation4 + $0x100] sm:$0xff]
    %v237 = vld [vmem:[#allocation4 + $0x108] sm:$0xff]
    %v238 = vld [vmem:[#allocation4 + $0x110] sm:$0xff]
    %v239 = vld [vmem:[#allocation4 + $0x118] sm:$0xff]
    %s240 = scalar_lea.vmem [#allocation6], 1
    %v241 = vld [vmem:[%s240] ss:$8 sm:$0x3]
    %v243 = vlaneseq
    %v244 = vshrl.u32 %v243, 7
    %v245 = vsub.s32 0, %v244
    %v246 = vrot.slane %v241, %v245
    %v247 = vlaneseq
    %v248 = vshrl.u32 %v247, 7
    %v249 = vsub.s32 1, %v248
    %v250 = vrot.slane %v241, %v249
    %v285 = vunpack.c.l.b16 %v208
    %v286 = vunpack.c.h.b16 %v208
    %v287 = vunpack.c.l.b16 %v209
    %v288 = vunpack.c.h.b16 %v209
    %v289 = vunpack.c.l.b16 %v210
    %v290 = vunpack.c.h.b16 %v210
    %v291 = vunpack.c.l.b16 %v211
    %v292 = vunpack.c.h.b16 %v211
    %v293 = vunpack.c.l.b16 %v212
    %v294 = vunpack.c.h.b16 %v212
    %v295 = vunpack.c.l.b16 %v213
    %v296 = vunpack.c.h.b16 %v213
    %v297 = vunpack.c.l.b16 %v214
    %v298 = vunpack.c.h.b16 %v214
    %v299 = vunpack.c.l.b16 %v215
    %v300 = vunpack.c.h.b16 %v215
    %v301 = vunpack.c.l.b16 %v216
    %v302 = vunpack.c.h.b16 %v216
    %v303 = vunpack.c.l.b16 %v217
    %v304 = vunpack.c.h.b16 %v217
    %v305 = vunpack.c.l.b16 %v218
    %v306 = vunpack.c.h.b16 %v218
    %v307 = vunpack.c.l.b16 %v219
    %v308 = vunpack.c.h.b16 %v219
    %v309 = vunpack.c.l.b16 %v220
    %v310 = vunpack.c.h.b16 %v220
    %v311 = vunpack.c.l.b16 %v221
    %v312 = vunpack.c.h.b16 %v221
    %v313 = vunpack.c.l.b16 %v222
    %v314 = vunpack.c.h.b16 %v222
    %v315 = vunpack.c.l.b16 %v223
    %v316 = vunpack.c.h.b16 %v223
    %v317 = vunpack.c.l.b16 %v224
    %v318 = vunpack.c.h.b16 %v224
    %v319 = vunpack.c.l.b16 %v225
    %v320 = vunpack.c.h.b16 %v225
    %v321 = vunpack.c.l.b16 %v226
    %v322 = vunpack.c.h.b16 %v226
    %v323 = vunpack.c.l.b16 %v227
    %v324 = vunpack.c.h.b16 %v227
    %v325 = vunpack.c.l.b16 %v228
    %v326 = vunpack.c.h.b16 %v228
    %v327 = vunpack.c.l.b16 %v229
    %v328 = vunpack.c.h.b16 %v229
    %v329 = vunpack.c.l.b16 %v230
    %v330 = vunpack.c.h.b16 %v230
    %v331 = vunpack.c.l.b16 %v231
    %v332 = vunpack.c.h.b16 %v231
    %v333 = vunpack.c.l.b16 %v232
    %v334 = vunpack.c.h.b16 %v232
    %v335 = vunpack.c.l.b16 %v233
    %v336 = vunpack.c.h.b16 %v233
    %v337 = vunpack.c.l.b16 %v234
    %v338 = vunpack.c.h.b16 %v234
    %v339 = vunpack.c.l.b16 %v235
    %v340 = vunpack.c.h.b16 %v235
    %v341 = vunpack.c.l.b16 %v236
    %v342 = vunpack.c.h.b16 %v236
    %v343 = vunpack.c.l.b16 %v237
    %v344 = vunpack.c.h.b16 %v237
    %v345 = vunpack.c.l.b16 %v238
    %v346 = vunpack.c.h.b16 %v238
    %v347 = vunpack.c.l.b16 %v239
    %v348 = vunpack.c.h.b16 %v239
    %v349 = vpack.c.b16 %v287, %v285
    %v350 = vpack.c.b16 %v288, %v286
    %v351 = vpack.c.b16 %v291, %v289
    %v352 = vpack.c.b16 %v292, %v290
    %v353 = vpack.c.b16 %v295, %v293
    %v354 = vpack.c.b16 %v296, %v294
    %v355 = vpack.c.b16 %v299, %v297
    %v356 = vpack.c.b16 %v300, %v298
    %v357 = vpack.c.b16 %v303, %v301
    %v358 = vpack.c.b16 %v304, %v302
    %v359 = vpack.c.b16 %v307, %v305
    %v360 = vpack.c.b16 %v308, %v306
    %v361 = vpack.c.b16 %v311, %v309
    %v362 = vpack.c.b16 %v312, %v310
    %v363 = vpack.c.b16 %v315, %v313
    %v364 = vpack.c.b16 %v316, %v314
    %v365 = vpack.c.b16 %v319, %v317
    %v366 = vpack.c.b16 %v320, %v318
    %v367 = vpack.c.b16 %v323, %v321
    %v368 = vpack.c.b16 %v324, %v322
    %v369 = vpack.c.b16 %v327, %v325
    %v370 = vpack.c.b16 %v328, %v326
    %v371 = vpack.c.b16 %v331, %v329
    %v372 = vpack.c.b16 %v332, %v330
    %v373 = vpack.c.b16 %v335, %v333
    %v374 = vpack.c.b16 %v336, %v334
    %v375 = vpack.c.b16 %v339, %v337
    %v376 = vpack.c.b16 %v340, %v338
    %v377 = vpack.c.b16 %v343, %v341
    %v378 = vpack.c.b16 %v344, %v342
    %v379 = vpack.c.b16 %v347, %v345
    %v380 = vpack.c.b16 %v348, %v346
    %413 = vmatprep.subr.bf16.mxu0 %v350
    %414 = vmatpush1.bf16.msra.mxu0 %v349
    %415 = vmatprep.subr.bf16.mxu0 %v352
    %416 = vmatpush1.bf16.msra.mxu0 %v351
    %417 = vmatprep.subr.bf16.mxu0 %v354
    %418 = vmatpush1.bf16.msra.mxu0 %v353
    %419 = vmatprep.subr.bf16.mxu0 %v356
    %420 = vmatpush1.bf16.msra.mxu0 %v355
    %421 = vmatprep.subr.bf16.mxu0 %v358
    %422 = vmatpush1.bf16.msra.mxu0 %v357
    %423 = vmatprep.subr.bf16.mxu0 %v360
    %424 = vmatpush1.bf16.msra.mxu0 %v359
    %425 = vmatprep.subr.bf16.mxu0 %v362
    %426 = vmatpush1.bf16.msra.mxu0 %v361
    %427 = vmatprep.subr.bf16.mxu0 %v364
    %428 = vmatpush1.bf16.msra.mxu0 %v363
    %429 = vmatprep.subr.bf16.mxu0 %v366
    %430 = vmatpush1.bf16.msra.mxu0 %v365
    %431 = vmatprep.subr.bf16.mxu0 %v368
    %432 = vmatpush1.bf16.msra.mxu0 %v367
    %433 = vmatprep.subr.bf16.mxu0 %v370
    %434 = vmatpush1.bf16.msra.mxu0 %v369
    %435 = vmatprep.subr.bf16.mxu0 %v372
    %436 = vmatpush1.bf16.msra.mxu0 %v371
    %437 = vmatprep.subr.bf16.mxu0 %v374
    %438 = vmatpush1.bf16.msra.mxu0 %v373
    %439 = vmatprep.subr.bf16.mxu0 %v376
    %440 = vmatpush1.bf16.msra.mxu0 %v375
    %441 = vmatprep.subr.bf16.mxu0 %v378
    %442 = vmatpush1.bf16.msra.mxu0 %v377
    %443 = vmatprep.subr.bf16.mxu0 %v380
    %444 = vmatpush1.bf16.msra.mxu0 %v379
    %445 = vmatprep.mubr.bf16.mxu0 %v207
    %446 = vmatmul.mubr.bf16.gmra.mrb[0].mxu0 %v206
    %v447 = vpop.f32.mrb[0].mxu0
    %v448 = vadd.f32 %v246, %v447
    %v449 = vpop.f32.mrb[0].mxu0
    %v450 = vadd.f32 %v250, %v449
    %v451 = vpop.f32.mrb[0].mxu0
    %v452 = vpop.f32.mrb[0].mxu0
    %453 = vdwg.mxu0
    %v454 = vld [vmem:[#allocation6 + $0x6] ss:$0 sm:$0xff]
    %v455 = vld [vmem:[#allocation6 + $0x7] ss:$0 sm:$0xff]
    %v456 = vmul.f32 %v448, %v448
    %v457 = vmul.f32 %v450, %v450
    %v458 = vadd.f32 %v448, %v450
    %v459 = vadd.f32 %v456, %v457
    %461 = vrot.lane.b32.xlu0 %v458, 64
    %v462 = vpop.permute.xlu0 %461
    %v464 = vadd.f32 %v458, %v462
    %466 = vrot.lane.b32.xlu0 %v459, 64
    %v467 = vpop.permute.xlu0 %466
    %v469 = vadd.f32 %v459, %v467
    %471 = vrot.lane.b32.xlu0 %v464, 96
    %v472 = vpop.permute.xlu0 %471
    %v474 = vadd.f32 %v464, %v472
    %476 = vrot.lane.b32.xlu0 %v469, 96
    %v477 = vpop.permute.xlu0 %476
    %v479 = vadd.f32 %v469, %v477
    %vm480 = vcmask 257024
    %v481 = vsel %vm480, %v474, 0.0
    %v482 = vrot.slane %v481, 4
    %v483 = vadd.f32 %v481, %v482
    %v484 = vrot.slane %v483, 2
    %v485 = vadd.f32 %v483, %v484
    %v486 = vrot.slane %v485, 1
    %v487 = vadd.f32 %v485, %v486
    %v488 = vmul.f32 %v487, 0.03125
    %v489 = vsel %vm480, %v479, 0.0
    %v490 = vrot.slane %v489, 4
    %v491 = vadd.f32 %v489, %v490
    %v492 = vrot.slane %v491, 2
    %v493 = vadd.f32 %v491, %v492
    %v494 = vrot.slane %v493, 1
    %v495 = vadd.f32 %v493, %v494
    %v496 = vmul.f32 %v495, 0.03125
    %v497 = vmul.f32 %v488, %v488
    %v498 = vsub.f32 %v496, %v497
    %v499 = vadd.f32 %v498, 1e-05
    %v500 = vrsqrt.pop %v499
    %v501 = vmul.f32 %v454, %v500
    %v502 = vmul.f32 %v488, %v501
    %v503 = vsub.f32 %v455, %v502
    %505 = vrot.lane.b32.xlu0 %v501, 32
    %v506 = vpop.permute.xlu0 %505
    %v508 = vsel %vm92, %v501, %v506
    %510 = vrot.lane.b32.xlu0 %v508, 64
    %v511 = vpop.permute.xlu0 %510
    %v513 = vsel %vm181, %v508, %v511
    %v514 = vlaneseq
    %v515 = vshrl.u32 %v514, 7
    %v516 = vsub.s32 0, %v515
    %v517 = vrot.slane %v513, %v516
    %v518 = vmul.f32 %v448, %v517
    %v519 = vmul.f32 %v450, %v517
    %521 = vrot.lane.b32.xlu0 %v503, 32
    %v522 = vpop.permute.xlu0 %521
    %v524 = vsel %vm92, %v503, %v522
    %526 = vrot.lane.b32.xlu0 %v524, 64
    %v527 = vpop.permute.xlu0 %526
    %v529 = vsel %vm181, %v524, %v527
    %v530 = vlaneseq
    %v531 = vshrl.u32 %v530, 7
    %v532 = vsub.s32 0, %v531
    %v533 = vrot.slane %v529, %v532
    %v534 = vadd.f32 %v518, %v533
    %v535 = vadd.f32 %v519, %v533
    %vm536 = vcmp.gt.f32.partialorder %v534, 0.0
    %vm537 = vcmp.gt.f32.partialorder %v535, 0.0
    %v538 = vmul.f32 %v534, 0.2
    %v539 = vmul.f32 %v535, 0.2
    %v540 = vsel %vm536, %v534, %v538
    %v541 = vsel %vm537, %v535, %v539
    %v542 = vpack.c.bf16 %v540, %v540
    %v543 = vpack.c.bf16 %v541, %v541
    %v544 = vld [vmem:[#allocation4 + $0x120] sm:$0xff]
    %v545 = vld [vmem:[#allocation4 + $0x128] sm:$0xff]
    %v546 = vld [vmem:[#allocation4 + $0x130] sm:$0xff]
    %v547 = vld [vmem:[#allocation4 + $0x138] sm:$0xff]
    %v548 = vld [vmem:[#allocation4 + $0x140] sm:$0xff]
    %v549 = vld [vmem:[#allocation4 + $0x148] sm:$0xff]
    %v550 = vld [vmem:[#allocation4 + $0x150] sm:$0xff]
    %v551 = vld [vmem:[#allocation4 + $0x158] sm:$0xff]
    %v552 = vld [vmem:[#allocation4 + $0x160] sm:$0xff]
    %v553 = vld [vmem:[#allocation4 + $0x168] sm:$0xff]
    %v554 = vld [vmem:[#allocation4 + $0x170] sm:$0xff]
    %v555 = vld [vmem:[#allocation4 + $0x178] sm:$0xff]
    %v556 = vld [vmem:[#allocation4 + $0x180] sm:$0xff]
    %v557 = vld [vmem:[#allocation4 + $0x188] sm:$0xff]
    %v558 = vld [vmem:[#allocation4 + $0x190] sm:$0xff]
    %v559 = vld [vmem:[#allocation4 + $0x198] sm:$0xff]
    %v560 = vld [vmem:[#allocation4 + $0x1a0] sm:$0xff]
    %v561 = vld [vmem:[#allocation4 + $0x1a8] sm:$0xff]
    %v562 = vld [vmem:[#allocation4 + $0x1b0] sm:$0xff]
    %v563 = vld [vmem:[#allocation4 + $0x1b8] sm:$0xff]
    %v564 = vld [vmem:[#allocation4 + $0x1c0] sm:$0xff]
    %v565 = vld [vmem:[#allocation4 + $0x1c8] sm:$0xff]
    %v566 = vld [vmem:[#allocation4 + $0x1d0] sm:$0xff]
    %v567 = vld [vmem:[#allocation4 + $0x1d8] sm:$0xff]
    %v568 = vld [vmem:[#allocation4 + $0x1e0] sm:$0xff]
    %v569 = vld [vmem:[#allocation4 + $0x1e8] sm:$0xff]
    %v570 = vld [vmem:[#allocation4 + $0x1f0] sm:$0xff]
    %v571 = vld [vmem:[#allocation4 + $0x1f8] sm:$0xff]
    %v572 = vld [vmem:[#allocation4 + $0x200] sm:$0xff]
    %v573 = vld [vmem:[#allocation4 + $0x208] sm:$0xff]
    %v574 = vld [vmem:[#allocation4 + $0x210] sm:$0xff]
    %v575 = vld [vmem:[#allocation4 + $0x218] sm:$0xff]
    %s576 = scalar_lea.vmem [#allocation6], 2
    %v577 = vld [vmem:[%s576] ss:$8 sm:$0x3]
    %v579 = vlaneseq
    %v580 = vshrl.u32 %v579, 7
    %v581 = vsub.s32 0, %v580
    %v582 = vrot.slane %v577, %v581
    %v583 = vlaneseq
    %v584 = vshrl.u32 %v583, 7
    %v585 = vsub.s32 1, %v584
    %v586 = vrot.slane %v577, %v585
    %v621 = vunpack.c.l.b16 %v544
    %v622 = vunpack.c.h.b16 %v544
    %v623 = vunpack.c.l.b16 %v545
    %v624 = vunpack.c.h.b16 %v545
    %v625 = vunpack.c.l.b16 %v546
    %v626 = vunpack.c.h.b16 %v546
    %v627 = vunpack.c.l.b16 %v547
    %v628 = vunpack.c.h.b16 %v547
    %v629 = vunpack.c.l.b16 %v548
    %v630 = vunpack.c.h.b16 %v548
    %v631 = vunpack.c.l.b16 %v549
    %v632 = vunpack.c.h.b16 %v549
    %v633 = vunpack.c.l.b16 %v550
    %v634 = vunpack.c.h.b16 %v550
    %v635 = vunpack.c.l.b16 %v551
    %v636 = vunpack.c.h.b16 %v551
    %v637 = vunpack.c.l.b16 %v552
    %v638 = vunpack.c.h.b16 %v552
    %v639 = vunpack.c.l.b16 %v553
    %v640 = vunpack.c.h.b16 %v553
    %v641 = vunpack.c.l.b16 %v554
    %v642 = vunpack.c.h.b16 %v554
    %v643 = vunpack.c.l.b16 %v555
    %v644 = vunpack.c.h.b16 %v555
    %v645 = vunpack.c.l.b16 %v556
    %v646 = vunpack.c.h.b16 %v556
    %v647 = vunpack.c.l.b16 %v557
    %v648 = vunpack.c.h.b16 %v557
    %v649 = vunpack.c.l.b16 %v558
    %v650 = vunpack.c.h.b16 %v558
    %v651 = vunpack.c.l.b16 %v559
    %v652 = vunpack.c.h.b16 %v559
    %v653 = vunpack.c.l.b16 %v560
    %v654 = vunpack.c.h.b16 %v560
    %v655 = vunpack.c.l.b16 %v561
    %v656 = vunpack.c.h.b16 %v561
    %v657 = vunpack.c.l.b16 %v562
    %v658 = vunpack.c.h.b16 %v562
    %v659 = vunpack.c.l.b16 %v563
    %v660 = vunpack.c.h.b16 %v563
    %v661 = vunpack.c.l.b16 %v564
    %v662 = vunpack.c.h.b16 %v564
    %v663 = vunpack.c.l.b16 %v565
    %v664 = vunpack.c.h.b16 %v565
    %v665 = vunpack.c.l.b16 %v566
    %v666 = vunpack.c.h.b16 %v566
    %v667 = vunpack.c.l.b16 %v567
    %v668 = vunpack.c.h.b16 %v567
    %v669 = vunpack.c.l.b16 %v568
    %v670 = vunpack.c.h.b16 %v568
    %v671 = vunpack.c.l.b16 %v569
    %v672 = vunpack.c.h.b16 %v569
    %v673 = vunpack.c.l.b16 %v570
    %v674 = vunpack.c.h.b16 %v570
    %v675 = vunpack.c.l.b16 %v571
    %v676 = vunpack.c.h.b16 %v571
    %v677 = vunpack.c.l.b16 %v572
    %v678 = vunpack.c.h.b16 %v572
    %v679 = vunpack.c.l.b16 %v573
    %v680 = vunpack.c.h.b16 %v573
    %v681 = vunpack.c.l.b16 %v574
    %v682 = vunpack.c.h.b16 %v574
    %v683 = vunpack.c.l.b16 %v575
    %v684 = vunpack.c.h.b16 %v575
    %v685 = vpack.c.b16 %v623, %v621
    %v686 = vpack.c.b16 %v624, %v622
    %v687 = vpack.c.b16 %v627, %v625
    %v688 = vpack.c.b16 %v628, %v626
    %v689 = vpack.c.b16 %v631, %v629
    %v690 = vpack.c.b16 %v632, %v630
    %v691 = vpack.c.b16 %v635, %v633
    %v692 = vpack.c.b16 %v636, %v634
    %v693 = vpack.c.b16 %v639, %v637
    %v694 = vpack.c.b16 %v640, %v638
    %v695 = vpack.c.b16 %v643, %v641
    %v696 = vpack.c.b16 %v644, %v642
    %v697 = vpack.c.b16 %v647, %v645
    %v698 = vpack.c.b16 %v648, %v646
    %v699 = vpack.c.b16 %v651, %v649
    %v700 = vpack.c.b16 %v652, %v650
    %v701 = vpack.c.b16 %v655, %v653
    %v702 = vpack.c.b16 %v656, %v654
    %v703 = vpack.c.b16 %v659, %v657
    %v704 = vpack.c.b16 %v660, %v658
    %v705 = vpack.c.b16 %v663, %v661
    %v706 = vpack.c.b16 %v664, %v662
    %v707 = vpack.c.b16 %v667, %v665
    %v708 = vpack.c.b16 %v668, %v666
    %v709 = vpack.c.b16 %v671, %v669
    %v710 = vpack.c.b16 %v672, %v670
    %v711 = vpack.c.b16 %v675, %v673
    %v712 = vpack.c.b16 %v676, %v674
    %v713 = vpack.c.b16 %v679, %v677
    %v714 = vpack.c.b16 %v680, %v678
    %v715 = vpack.c.b16 %v683, %v681
    %v716 = vpack.c.b16 %v684, %v682
    %749 = vmatprep.subr.bf16.mxu0 %v686
    %750 = vmatpush1.bf16.msra.mxu0 %v685
    %751 = vmatprep.subr.bf16.mxu0 %v688
    %752 = vmatpush1.bf16.msra.mxu0 %v687
    %753 = vmatprep.subr.bf16.mxu0 %v690
    %754 = vmatpush1.bf16.msra.mxu0 %v689
    %755 = vmatprep.subr.bf16.mxu0 %v692
    %756 = vmatpush1.bf16.msra.mxu0 %v691
    %757 = vmatprep.subr.bf16.mxu0 %v694
    %758 = vmatpush1.bf16.msra.mxu0 %v693
    %759 = vmatprep.subr.bf16.mxu0 %v696
    %760 = vmatpush1.bf16.msra.mxu0 %v695
    %761 = vmatprep.subr.bf16.mxu0 %v698
    %762 = vmatpush1.bf16.msra.mxu0 %v697
    %763 = vmatprep.subr.bf16.mxu0 %v700
    %764 = vmatpush1.bf16.msra.mxu0 %v699
    %765 = vmatprep.subr.bf16.mxu0 %v702
    %766 = vmatpush1.bf16.msra.mxu0 %v701
    %767 = vmatprep.subr.bf16.mxu0 %v704
    %768 = vmatpush1.bf16.msra.mxu0 %v703
    %769 = vmatprep.subr.bf16.mxu0 %v706
    %770 = vmatpush1.bf16.msra.mxu0 %v705
    %771 = vmatprep.subr.bf16.mxu0 %v708
    %772 = vmatpush1.bf16.msra.mxu0 %v707
    %773 = vmatprep.subr.bf16.mxu0 %v710
    %774 = vmatpush1.bf16.msra.mxu0 %v709
    %775 = vmatprep.subr.bf16.mxu0 %v712
    %776 = vmatpush1.bf16.msra.mxu0 %v711
    %777 = vmatprep.subr.bf16.mxu0 %v714
    %778 = vmatpush1.bf16.msra.mxu0 %v713
    %779 = vmatprep.subr.bf16.mxu0 %v716
    %780 = vmatpush1.bf16.msra.mxu0 %v715
    %781 = vmatprep.mubr.bf16.mxu0 %v543
    %782 = vmatmul.mubr.bf16.gmra.mrb[0].mxu0 %v542
    %v783 = vpop.f32.mrb[0].mxu0
    %v784 = vadd.f32 %v582, %v783
    %v785 = vpop.f32.mrb[0].mxu0
    %v786 = vadd.f32 %v586, %v785
    %v787 = vpop.f32.mrb[0].mxu0
    %v788 = vpop.f32.mrb[0].mxu0
    %789 = vdwg.mxu0
    %v790 = vld [vmem:[#allocation6 + $0x10] ss:$0 sm:$0xff]
    %v791 = vld [vmem:[#allocation6 + $0x11] ss:$0 sm:$0xff]
    %v792 = vmul.f32 %v784, %v784
    %v793 = vmul.f32 %v786, %v786
    %v794 = vadd.f32 %v784, %v786
    %v795 = vadd.f32 %v792, %v793
    %797 = vrot.lane.b32.xlu0 %v794, 64
    %v798 = vpop.permute.xlu0 %797
    %v800 = vadd.f32 %v794, %v798
    %802 = vrot.lane.b32.xlu0 %v795, 64
    %v803 = vpop.permute.xlu0 %802
    %v805 = vadd.f32 %v795, %v803
    %807 = vrot.lane.b32.xlu0 %v800, 96
    %v808 = vpop.permute.xlu0 %807
    %v810 = vadd.f32 %v800, %v808
    %812 = vrot.lane.b32.xlu0 %v805, 96
    %v813 = vpop.permute.xlu0 %812
    %v815 = vadd.f32 %v805, %v813
    %817 = vrot.lane.b32.xlu0 %v810, 112
    %v818 = vpop.permute.xlu0 %817
    %v820 = vadd.f32 %v810, %v818
    %822 = vrot.lane.b32.xlu0 %v815, 112
    %v823 = vpop.permute.xlu0 %822
    %v825 = vadd.f32 %v815, %v823
    %vm826 = vcmask 125952
    %v827 = vsel %vm826, %v820, 0.0
    %v828 = vrot.slane %v827, 4
    %v829 = vadd.f32 %v827, %v828
    %v830 = vrot.slane %v829, 2
    %v831 = vadd.f32 %v829, %v830
    %v832 = vrot.slane %v831, 1
    %v833 = vadd.f32 %v831, %v832
    %v834 = vmul.f32 %v833, 0.015625
    %v835 = vsel %vm826, %v825, 0.0
    %v836 = vrot.slane %v835, 4
    %v837 = vadd.f32 %v835, %v836
    %v838 = vrot.slane %v837, 2
    %v839 = vadd.f32 %v837, %v838
    %v840 = vrot.slane %v839, 1
    %v841 = vadd.f32 %v839, %v840
    %v842 = vmul.f32 %v841, 0.015625
    %v843 = vmul.f32 %v834, %v834
    %v844 = vsub.f32 %v842, %v843
    %v845 = vadd.f32 %v844, 1e-05
    %v846 = vrsqrt.pop %v845
    %v847 = vmul.f32 %v790, %v846
    %v848 = vmul.f32 %v834, %v847
    %v849 = vsub.f32 %v791, %v848
    %851 = vrot.lane.b32.xlu0 %v847, 16
    %v852 = vpop.permute.xlu0 %851
    %vm854 = vcmask 130048
    %v855 = vsel %vm854, %v847, %v852
    %857 = vrot.lane.b32.xlu0 %v855, 32
    %v858 = vpop.permute.xlu0 %857
    %v860 = vsel %vm92, %v855, %v858
    %862 = vrot.lane.b32.xlu0 %v860, 64
    %v863 = vpop.permute.xlu0 %862
    %v865 = vsel %vm181, %v860, %v863
    %v866 = vlaneseq
    %v867 = vshrl.u32 %v866, 7
    %v868 = vsub.s32 0, %v867
    %v869 = vrot.slane %v865, %v868
    %v870 = vmul.f32 %v784, %v869
    %v871 = vmul.f32 %v786, %v869
    %873 = vrot.lane.b32.xlu0 %v849, 16
    %v874 = vpop.permute.xlu0 %873
    %v876 = vsel %vm854, %v849, %v874
    %878 = vrot.lane.b32.xlu0 %v876, 32
    %v879 = vpop.permute.xlu0 %878
    %v881 = vsel %vm92, %v876, %v879
    %883 = vrot.lane.b32.xlu0 %v881, 64
    %v884 = vpop.permute.xlu0 %883
    %v886 = vsel %vm181, %v881, %v884
    %v887 = vlaneseq
    %v888 = vshrl.u32 %v887, 7
    %v889 = vsub.s32 0, %v888
    %v890 = vrot.slane %v886, %v889
    %v891 = vadd.f32 %v870, %v890
    %v892 = vadd.f32 %v871, %v890
    %vm893 = vcmp.gt.f32.partialorder %v891, 0.0
    %vm894 = vcmp.gt.f32.partialorder %v892, 0.0
    %v895 = vmul.f32 %v891, 0.2
    %v896 = vmul.f32 %v892, 0.2
    %v897 = vsel %vm893, %v891, %v895
    %v898 = vsel %vm894, %v892, %v896
    %v899 = vpack.c.bf16 %v897, %v897
    %v900 = vpack.c.bf16 %v898, %v898
    %v901 = vld [vmem:[#allocation4 + $0x220] sm:$0xf]
    %v902 = vld [vmem:[#allocation4 + $0x228] sm:$0xf]
    %v903 = vld [vmem:[#allocation4 + $0x230] sm:$0xf]
    %v904 = vld [vmem:[#allocation4 + $0x238] sm:$0xf]
    %v905 = vld [vmem:[#allocation4 + $0x240] sm:$0xf]
    %v906 = vld [vmem:[#allocation4 + $0x248] sm:$0xf]
    %v907 = vld [vmem:[#allocation4 + $0x250] sm:$0xf]
    %v908 = vld [vmem:[#allocation4 + $0x258] sm:$0xf]
    %v909 = vld [vmem:[#allocation4 + $0x260] sm:$0xf]
    %v910 = vld [vmem:[#allocation4 + $0x268] sm:$0xf]
    %v911 = vld [vmem:[#allocation4 + $0x270] sm:$0xf]
    %v912 = vld [vmem:[#allocation4 + $0x278] sm:$0xf]
    %v913 = vld [vmem:[#allocation4 + $0x280] sm:$0xf]
    %v914 = vld [vmem:[#allocation4 + $0x288] sm:$0xf]
    %v915 = vld [vmem:[#allocation4 + $0x290] sm:$0xf]
    %v916 = vld [vmem:[#allocation4 + $0x298] sm:$0xf]
    %v917 = vld [vmem:[#allocation4 + $0x2a0] sm:$0xf]
    %v918 = vld [vmem:[#allocation4 + $0x2a8] sm:$0xf]
    %v919 = vld [vmem:[#allocation4 + $0x2b0] sm:$0xf]
    %v920 = vld [vmem:[#allocation4 + $0x2b8] sm:$0xf]
    %v921 = vld [vmem:[#allocation4 + $0x2c0] sm:$0xf]
    %v922 = vld [vmem:[#allocation4 + $0x2c8] sm:$0xf]
    %v923 = vld [vmem:[#allocation4 + $0x2d0] sm:$0xf]
    %v924 = vld [vmem:[#allocation4 + $0x2d8] sm:$0xf]
    %v925 = vld [vmem:[#allocation4 + $0x2e0] sm:$0xf]
    %v926 = vld [vmem:[#allocation4 + $0x2e8] sm:$0xf]
    %v927 = vld [vmem:[#allocation4 + $0x2f0] sm:$0xf]
    %v928 = vld [vmem:[#allocation4 + $0x2f8] sm:$0xf]
    %v929 = vld [vmem:[#allocation4 + $0x300] sm:$0xf]
    %v930 = vld [vmem:[#allocation4 + $0x308] sm:$0xf]
    %v931 = vld [vmem:[#allocation4 + $0x310] sm:$0xf]
    %v932 = vld [vmem:[#allocation4 + $0x318] sm:$0xf]
    %v933 = vld [vmem:[#allocation6 + $0x3] ss:$0 sm:$0xff]
    %v966 = vunpack.c.l.b16 %v901
    %v967 = vunpack.c.l.b16 %v902
    %v968 = vunpack.c.l.b16 %v903
    %v969 = vunpack.c.l.b16 %v904
    %v970 = vunpack.c.l.b16 %v905
    %v971 = vunpack.c.l.b16 %v906
    %v972 = vunpack.c.l.b16 %v907
    %v973 = vunpack.c.l.b16 %v908
    %v974 = vunpack.c.l.b16 %v909
    %v975 = vunpack.c.l.b16 %v910
    %v976 = vunpack.c.l.b16 %v911
    %v977 = vunpack.c.l.b16 %v912
    %v978 = vunpack.c.l.b16 %v913
    %v979 = vunpack.c.l.b16 %v914
    %v980 = vunpack.c.l.b16 %v915
    %v981 = vunpack.c.l.b16 %v916
    %v982 = vunpack.c.l.b16 %v917
    %v983 = vunpack.c.l.b16 %v918
    %v984 = vunpack.c.l.b16 %v919
    %v985 = vunpack.c.l.b16 %v920
    %v986 = vunpack.c.l.b16 %v921
    %v987 = vunpack.c.l.b16 %v922
    %v988 = vunpack.c.l.b16 %v923
    %v989 = vunpack.c.l.b16 %v924
    %v990 = vunpack.c.l.b16 %v925
    %v991 = vunpack.c.l.b16 %v926
    %v992 = vunpack.c.l.b16 %v927
    %v993 = vunpack.c.l.b16 %v928
    %v994 = vunpack.c.l.b16 %v929
    %v995 = vunpack.c.l.b16 %v930
    %v996 = vunpack.c.l.b16 %v931
    %v997 = vunpack.c.l.b16 %v932
    %v998 = vpack.c.b16 %v967, %v966
    %v999 = vpack.c.b16 %v969, %v968
    %v1000 = vpack.c.b16 %v971, %v970
    %v1001 = vpack.c.b16 %v973, %v972
    %v1002 = vpack.c.b16 %v975, %v974
    %v1003 = vpack.c.b16 %v977, %v976
    %v1004 = vpack.c.b16 %v979, %v978
    %v1005 = vpack.c.b16 %v981, %v980
    %v1006 = vpack.c.b16 %v983, %v982
    %v1007 = vpack.c.b16 %v985, %v984
    %v1008 = vpack.c.b16 %v987, %v986
    %v1009 = vpack.c.b16 %v989, %v988
    %v1010 = vpack.c.b16 %v991, %v990
    %v1011 = vpack.c.b16 %v993, %v992
    %v1012 = vpack.c.b16 %v995, %v994
    %v1013 = vpack.c.b16 %v997, %v996
    %1030 = vmatprep.subr.bf16.mxu0 0
    %1031 = vmatpush1.bf16.msra.mxu0 %v998
    %1032 = vmatprep.subr.bf16.mxu0 0
    %1033 = vmatpush1.bf16.msra.mxu0 %v999
    %1034 = vmatprep.subr.bf16.mxu0 0
    %1035 = vmatpush1.bf16.msra.mxu0 %v1000
    %1036 = vmatprep.subr.bf16.mxu0 0
    %1037 = vmatpush1.bf16.msra.mxu0 %v1001
    %1038 = vmatprep.subr.bf16.mxu0 0
    %1039 = vmatpush1.bf16.msra.mxu0 %v1002
    %1040 = vmatprep.subr.bf16.mxu0 0
    %1041 = vmatpush1.bf16.msra.mxu0 %v1003
    %1042 = vmatprep.subr.bf16.mxu0 0
    %1043 = vmatpush1.bf16.msra.mxu0 %v1004
    %1044 = vmatprep.subr.bf16.mxu0 0
    %1045 = vmatpush1.bf16.msra.mxu0 %v1005
    %1046 = vmatprep.subr.bf16.mxu0 0
    %1047 = vmatpush1.bf16.msra.mxu0 %v1006
    %1048 = vmatprep.subr.bf16.mxu0 0
    %1049 = vmatpush1.bf16.msra.mxu0 %v1007
    %1050 = vmatprep.subr.bf16.mxu0 0
    %1051 = vmatpush1.bf16.msra.mxu0 %v1008
    %1052 = vmatprep.subr.bf16.mxu0 0
    %1053 = vmatpush1.bf16.msra.mxu0 %v1009
    %1054 = vmatprep.subr.bf16.mxu0 0
    %1055 = vmatpush1.bf16.msra.mxu0 %v1010
    %1056 = vmatprep.subr.bf16.mxu0 0
    %1057 = vmatpush1.bf16.msra.mxu0 %v1011
    %1058 = vmatprep.subr.bf16.mxu0 0
    %1059 = vmatpush1.bf16.msra.mxu0 %v1012
    %1060 = vmatprep.subr.bf16.mxu0 0
    %1061 = vmatpush1.bf16.msra.mxu0 %v1013
    %1062 = vmatprep.mubr.bf16.mxu0 %v900
    %1063 = vmatmul.mubr.bf16.gmra.mrb[0].mxu0 %v899
    %v1064 = vpop.f32.mrb[0].mxu0
    %v1065 = vadd.f32 %v933, %v1064
    %v1066 = vpop.f32.mrb[0].mxu0
    %v1067 = vpop.f32.mrb[0].mxu0
    %v1068 = vpop.f32.mrb[0].mxu0
    %1069 = vdwg.mxu0
    %v1070 = vxor.u32 %v1065, 2147483648
    %v1071 = vmul.f32 %v1070, 1.442695
    %v1072 = vpow.pop %v1071
    %v1073 = vadd.f32 %v1072, 1.0
    %v1074 = vrcp.pop %v1073
    %v1075 = vmul.f32 1.0, %v1074
    %1076 = vst [vmem:[%s3] sm:$0xf] %v1075
    // Predicated region
    $region26: #{generator_forward.1} parent=1 // pred_check
      _
    $region27: #{generator_forward.1} parent=1 // pred_check_branch
      %1078 = sbr.rel (0) target = $region29
    $region28: #{generator_forward.1} parent=1 // pred_region
      _
    $region29: #{generator_forward.1} parent=1 // pred_fallthru
      _
    // Predicated region
    $region30: #{generator_forward.1} parent=1 // pred_check
      _
    $region31: #{generator_forward.1} parent=1 // pred_check_branch
      %1080 = sbr.rel (0) target = $region33
    $region32: #{generator_forward.1} parent=1 // pred_region
      _
    $region33: #{generator_forward.1} parent=1 // pred_fallthru
      _
    %1081 = vsyncpa [#allocation3], 1
    %1082 = vsyncpa [#allocation5], 1

</llo_original>
